<compile_context>
chip_gen: v6e
topology: v6e:2x2x1
jax: 0.10.0
libtpu: 0.0.40
codegen_flags: <defaults>
</compile_context>

<pallas_src>
import jax
import jax.numpy as jnp
from jax.experimental import pallas as pl
from jax.experimental.pallas import tpu as pltpu


def _round_up(x, m):
    return ((x + m - 1) // m) * m


def _vmem_capacity_bytes():
    # v5e/v6e: 128 MiB per TC, v7x: 64 MiB.  Query when possible; fall back to
    # the smallest (v7x) so the derived limit is always physically valid.
    try:
        return int(pltpu.get_tpu_info().vmem_capacity_bytes)
    except Exception:
        return 64 * 1024 * 1024


def _choose_rows_tile(n_rows, dk_lanes, vmem_limit_bytes):
    """Largest row tile whose double-buffered x + out blocks fit in ~75% of the
    VMEM limit, preferring >=4 tiles (v7x megacore balance) when each tile
    would still carry >= ~2 MiB of x data."""
    # (8,128)-padded f32 footprint per row: x row (dk_lanes lanes) + output row
    # (k lanes, padded to one full 128-lane tile).
    bytes_per_row = 4 * (dk_lanes + 128)
    usable = (vmem_limit_bytes * 3 // 4) // 2        # /2: double buffering
    tb = max(8, usable // bytes_per_row)

    # v7x: two TensorCores share the grid under "parallel"; keep >=4 tiles if
    # each still holds >= ~2 MiB of x.
    min_rows_2mib = max(8, (2 * 1024 * 1024) // (4 * dk_lanes))
    quarter = _round_up((n_rows + 3) // 4, 8)
    if quarter >= min_rows_2mib:
        tb = min(tb, quarter)

    if tb >= n_rows:
        return n_rows                                # single full-extent block
    return max(8, (tb // 8) * 8)


def _make_kernel(d, k):
    """Row-local linear kernel over packed rows (k original rows per lane row)."""

    def kernel(x_ref, w_ref, b_ref, o_ref):
        # x_ref: (tb, k*d) VMEM   w_ref: (1, k*d) VMEM (lane-dense, reused)
        # b_ref: (1, 1)    SMEM   o_ref: (tb, k)   VMEM
        xw = x_ref[...] * w_ref[...]                 # VPU, broadcast over rows
        b = b_ref[0, 0]
        if k == 1:
            o_ref[...] = jnp.sum(xw, axis=-1, keepdims=True) + b
        else:
            # Segmented lane reduce: one dot product per packed segment.
            parts = [
                jnp.sum(xw[:, j * d:(j + 1) * d], axis=-1, keepdims=True)
                for j in range(k)
            ]
            o_ref[...] = jnp.concatenate(parts, axis=-1) + b

    return kernel


def linear_regression_forward(x, weight, bias):
    """x: (B, D) f32, weight: (1, D) f32, bias: (1,) f32 -> (B, 1) f32."""
    B, D = x.shape
    x = x.astype(jnp.float32)
    weight = weight.reshape(1, D).astype(jnp.float32)
    b2d = bias.reshape(1, 1).astype(jnp.float32)     # SMEM scalars must be >= 2D

    # --- row packing (lane-densify x and the output for D < 128) -----------
    k = 1
    if D < 128:
        k = max(1, 128 // D)
        while k > 1 and B % k != 0:                  # pack only without padding/copies
            k -= 1
    dk = D * k
    n_rows = B // k
    x_view = x if k == 1 else x.reshape(n_rows, dk)  # free: contiguous reshape
    w_k = weight if k == 1 else jnp.tile(weight, (1, k))

    # --- tiling / VMEM budget (padding-aware, generation-aware) ------------
    dk_lanes = _round_up(dk, 128)
    vmem_limit = int(min(3 * _vmem_capacity_bytes() // 4, 96 * 1024 * 1024))
    tb = _choose_rows_tile(n_rows, dk_lanes, vmem_limit)
    n_tiles = pl.cdiv(n_rows, tb)

    out = pl.pallas_call(
        _make_kernel(D, k),
        out_shape=jax.ShapeDtypeStruct((n_rows, k), jnp.float32),
        grid=(n_tiles,),
        in_specs=[
            pl.BlockSpec((tb, dk), lambda i: (i, 0)),        # x: row-tiled stream
            pl.BlockSpec((1, dk), lambda i: (0, 0)),         # weight: reused
            pl.BlockSpec(memory_space=pltpu.MemorySpace.SMEM),  # bias scalar
        ],
        out_specs=pl.BlockSpec((tb, k), lambda i: (i, 0)),
        compiler_params=pltpu.CompilerParams(
            dimension_semantics=("parallel",),       # shard tiles across TCs (v7x)
            vmem_limit_bytes=vmem_limit,
        ),
        cost_estimate=pl.CostEstimate(
            flops=2 * B * D,
            transcendentals=0,
            bytes_accessed=4 * (B * D + D + B),
        ),
    )(x_view, w_k, b2d)

    return out.reshape(B, 1)


if __name__ == "__main__":
    input_size = 32

    key = jax.random.PRNGKey(0)
    kx, kw, kb, kx2 = jax.random.split(key, 4)

    # Deterministic parameter init mimicking nn.Linear: U(-1/sqrt(D), 1/sqrt(D)).
    bound = 1.0 / (input_size ** 0.5)
    weight = jax.random.uniform(kw, (1, input_size), jnp.float32, -bound, bound)
    bias = jax.random.uniform(kb, (1,), jnp.float32, -bound, bound)

    # batch=8: divisible by k = 128//32 = 4 -> packed (lane-dense) path.
    x = jax.random.normal(kx, (8, input_size), jnp.float32)
    y = jax.block_until_ready(linear_regression_forward(x, weight, bias))
    y_ref = x @ weight.T + bias
    assert y.shape == (8, 1)
    assert jnp.allclose(y, y_ref, atol=1e-5, rtol=1e-5)

    # batch=13: not divisible by k -> unpacked path, ragged block, no padding.
    x2 = jax.random.normal(kx2, (13, input_size), jnp.float32)
    y2 = jax.block_until_ready(linear_regression_forward(x2, weight, bias))
    y2_ref = x2 @ weight.T + bias
    assert y2.shape == (13, 1)
    assert jnp.allclose(y2, y2_ref, atol=1e-5, rtol=1e-5)

    print("KERNEL_OK")
</pallas_src>

<mosaic_0001>
module attributes {stable_mosaic.version = 11 : i64} {
  func.func @kernel(%arg0: i32, %arg1: memref<2x128xf32, #tpu.memory_space<vmem>>, %arg2: memref<1x128xf32, #tpu.memory_space<vmem>>, %arg3: memref<1x1xf32, #tpu.memory_space<smem>>, %arg4: memref<2x4xf32, #tpu.memory_space<vmem>>) attributes {dimension_semantics = [#tpu.dimension_semantics<parallel>], iteration_bounds = array<i64: 1>, scalar_prefetch = 0 : i64, scratch_operands = 0 : i64, tpu.core_type = #tpu.core_type<tc>, window_params = [{transform_indices = @transform_0, window_bounds = array<i64: 2, 128>}, {pipeline_mode = #tpu.pipeline_mode<synchronous>, transform_indices = @transform_1, window_bounds = array<i64: 1, 128>}, {transform_indices = @transform_2, window_bounds = array<i64: 1, 1>}, {transform_indices = @transform_3, window_bounds = array<i64: 2, 4>}]} {
    %c0 = arith.constant 0 : index
    %c0_0 = arith.constant 0 : index
    %0 = vector.load %arg1[%c0, %c0_0] : memref<2x128xf32, #tpu.memory_space<vmem>>, vector<2x128xf32>
    %c0_1 = arith.constant 0 : index
    %c0_2 = arith.constant 0 : index
    %1 = vector.load %arg2[%c0_1, %c0_2] : memref<1x128xf32, #tpu.memory_space<vmem>>, vector<1x128xf32>
    %2 = vector.broadcast %1 : vector<1x128xf32> to vector<2x128xf32>
    %3 = arith.mulf %0, %2 : vector<2x128xf32>
    %c0_3 = arith.constant 0 : index
    %c0_4 = arith.constant 0 : index
    %4 = memref.load %arg3[%c0_3, %c0_4] : memref<1x1xf32, #tpu.memory_space<smem>>
    %5 = vector.extract_strided_slice %3 {offsets = [0, 0], sizes = [2, 32], strides = [1, 1]} : vector<2x128xf32> to vector<2x32xf32>
    %cst = arith.constant dense<0.000000e+00> : vector<2xf32>
    %6 = vector.multi_reduction <add>, %5, %cst [1] : vector<2x32xf32> to vector<2xf32>
    %7 = vector.shape_cast %6 : vector<2xf32> to vector<2x1xf32>
    %8 = vector.extract_strided_slice %3 {offsets = [0, 32], sizes = [2, 32], strides = [1, 1]} : vector<2x128xf32> to vector<2x32xf32>
    %cst_5 = arith.constant dense<0.000000e+00> : vector<2xf32>
    %9 = vector.multi_reduction <add>, %8, %cst_5 [1] : vector<2x32xf32> to vector<2xf32>
    %10 = vector.shape_cast %9 : vector<2xf32> to vector<2x1xf32>
    %11 = vector.extract_strided_slice %3 {offsets = [0, 64], sizes = [2, 32], strides = [1, 1]} : vector<2x128xf32> to vector<2x32xf32>
    %cst_6 = arith.constant dense<0.000000e+00> : vector<2xf32>
    %12 = vector.multi_reduction <add>, %11, %cst_6 [1] : vector<2x32xf32> to vector<2xf32>
    %13 = vector.shape_cast %12 : vector<2xf32> to vector<2x1xf32>
    %14 = vector.extract_strided_slice %3 {offsets = [0, 96], sizes = [2, 32], strides = [1, 1]} : vector<2x128xf32> to vector<2x32xf32>
    %cst_7 = arith.constant dense<0.000000e+00> : vector<2xf32>
    %15 = vector.multi_reduction <add>, %14, %cst_7 [1] : vector<2x32xf32> to vector<2xf32>
    %16 = vector.shape_cast %15 : vector<2xf32> to vector<2x1xf32>
    %17 = tpu.concatenate %7, %10, %13, %16 in 1 : vector<2x1xf32>, vector<2x1xf32>, vector<2x1xf32>, vector<2x1xf32> -> vector<2x4xf32>
    %18 = vector.broadcast %4 : f32 to vector<2x4xf32>
    %19 = arith.addf %17, %18 : vector<2x4xf32>
    %c0_8 = arith.constant 0 : index
    %c0_9 = arith.constant 0 : index
    %20 = vector.load %arg4[%c0_8, %c0_9] : memref<2x4xf32, #tpu.memory_space<vmem>>, vector<2x4xf32>
    tpu.vector_store %arg4[%c0_8, %c0_9], %19 {strides = array<i32>} : memref<2x4xf32, #tpu.memory_space<vmem>>, vector<2x4xf32>,
    return
  }
  func.func @transform_0(%arg0: i32) -> (i32, i32) {
    %c0_i32 = arith.constant 0 : i32
    %c0_i32_0 = arith.constant 0 : i32
    return %arg0, %c0_i32 : i32, i32
  }
  func.func @transform_1(%arg0: i32) -> (i32, i32) {
    %c0_i32 = arith.constant 0 : i32
    %c0_i32_0 = arith.constant 0 : i32
    %c0_i32_1 = arith.constant 0 : i32
    return %c0_i32, %c0_i32_0 : i32, i32
  }
  func.func @transform_2(%arg0: i32) -> (i32, i32) {
    %c0_i32 = arith.constant 0 : i32
    %c0_i32_0 = arith.constant 0 : i32
    %c0_i32_1 = arith.constant 0 : i32
    return %c0_i32, %c0_i32_0 : i32, i32
  }
  func.func @transform_3(%arg0: i32) -> (i32, i32) {
    %c0_i32 = arith.constant 0 : i32
    %c0_i32_0 = arith.constant 0 : i32
    return %arg0, %c0_i32 : i32, i32
  }
}

</mosaic_0001>

<llo_original>
// kernel: tpu_custom_call.1
$region0: #{tpu_custom_call.1}
  #allocation0 [shape = 'u32[]', space=smem, size = 0x4, offset = 0x4, fixed_abs, tag = 'smem constant byte address 0x4 - core index']
  #allocation1 [shape = 'u32[144,128]{1,0:T(1,128)}', space=vmem, size = 0x12000, scoped, tag = 'internal scratch']
  #allocation2 [shape = 'f32[1,1]{1,0:T(1,128)S(6)}', space=smem, size = 0x200, scoped, tag = 'scoped memory for tpu_custom_call.1']
  %s0 = inlined_call_operand.vmem [shape: f32[2,128], index: 0, kind: input, shape index: {}]
  %s1 = inlined_call_operand.vmem [shape: f32[1,128], index: 1, kind: input, shape index: {}]
  %s2 = inlined_call_operand.<no memory space> [shape: f32[1,1], index: 2, kind: input, shape index: {}]
  %s3 = inlined_call_operand.hbm [shape: f32[2,4], index: 3, kind: output, shape index: {}]
  %s4 = sld [smem:[#allocation0]]
  $region22: #{tpu_custom_call.1} parent=0
    _
  %s6 = ssub.s32 1, %s4
  %s7 = scalar_select 0, %s6, %s4
  %8 = sst [smem:[#allocation2]] %s2
  $region1: #{tpu_custom_call.1} parent=0
    #allocation3 [shape = 'u8[1024]{0}', space=vmem, size = 0x400, scoped, tag = 'output window, operand 0, single buffered']
    #allocation4 [shape = 's32[1]{0}', space=sflag, size = 0x4, scoped, tag = 'scoped memory for tpu_custom_call.1']
    %9 = vsyncpa [#allocation4], 0
    // Predicated region
    $region2: #{tpu_custom_call.1} parent=1 // pred_check
      _
    $region3: #{tpu_custom_call.1} parent=1 // pred_check_branch
      %11 = sbr.rel (0) target = $region5
    $region4: #{tpu_custom_call.1} parent=1 // pred_region
      _
    $region5: #{tpu_custom_call.1} parent=1 // pred_fallthru
      _
    // Predicated region
    $region6: #{tpu_custom_call.1} parent=1 // pred_check
      _
    $region7: #{tpu_custom_call.1} parent=1 // pred_check_branch
      %13 = sbr.rel (0) target = $region9
    $region8: #{tpu_custom_call.1} parent=1 // pred_region
      _
    $region9: #{tpu_custom_call.1} parent=1 // pred_fallthru
      _
    // Predicated region
    $region10: #{tpu_custom_call.1} parent=1 // pred_check
      _
    $region11: #{tpu_custom_call.1} parent=1 // pred_check_branch
      %15 = sbr.rel (0) target = $region13
    $region12: #{tpu_custom_call.1} parent=1 // pred_region
      _
    $region13: #{tpu_custom_call.1} parent=1 // pred_fallthru
      _
    %v16 = vld [vmem:[%s0] sm:$0x3]
    %v17 = vld [vmem:[%s1] sm:$0x1]
    %v19 = vlaneseq
    %v20 = vshrl.u32 %v19, 7
    %v21 = vsub.s32 0, %v20
    %v22 = vrot.slane %v17, %v21
    %v24 = vmul.f32 %v16, %v22
    %s25 = sld [smem:[#allocation2]]
    %vm26 = vcmask 254976
    %v27 = vsel %vm26, %v24, 0.0
    %28 = vadd.xlane.f32.xlu0 %v27
    %v29 = vpop.xlane.xlu0 %28
    %31 = vrot.lane.b32.xlu0 %v24, 96
    %v32 = vpop.permute.xlu0 %31
    %v34 = vsel %vm26, %v32, 0.0
    %35 = vadd.xlane.f32.xlu0 %v34
    %v36 = vpop.xlane.xlu0 %35
    %37 = vrot.lane.b32.xlu0 %v24, 64
    %v38 = vpop.permute.xlu0 %37
    %v40 = vsel %vm26, %v38, 0.0
    %41 = vadd.xlane.f32.xlu0 %v40
    %v42 = vpop.xlane.xlu0 %41
    %43 = vrot.lane.b32.xlu0 %v24, 32
    %v44 = vpop.permute.xlu0 %43
    %v46 = vsel %vm26, %v44, 0.0
    %47 = vadd.xlane.f32.xlu0 %v46
    %v48 = vpop.xlane.xlu0 %47
    %vm49 = vcmask 7168
    %v50 = vsel %vm49, %v29, %v36
    %vm51 = vcmask 15360
    %v52 = vsel %vm51, %v50, %v42
    %vm53 = vcmask 23552
    %v54 = vsel %vm53, %v52, %v48
    %v55 = vstv %s25
    %v56 = vadd.f32 %v54, %v55
    %vm57 = vcmask 25600
    %58 = vst.msk [vmem:[#allocation3] sm:$0x3] %vm57, %v56
    // Predicated region
    $region14: #{tpu_custom_call.1} parent=1 // pred_check
      _
    $region15: #{tpu_custom_call.1} parent=1 // pred_check_branch
      %60 = sbr.rel (0) target = $region17
    $region16: #{tpu_custom_call.1} parent=1 // pred_region
      %s62 = ssub.s32 32, 32
      %63 = vsyncadd [#allocation4], %s62
      %s65 = sshll.u32 [#allocation3], 4
      %s66 = int_to_ptr.vmem [resolvable:$true] %s65
      %68 = dma.vmem_to_hbm [thread:$0]  %s66, 32, %s3, [#allocation4]
    $region17: #{tpu_custom_call.1} parent=1 // pred_fallthru
      _
    // Predicated region
    $region18: #{tpu_custom_call.1} parent=1 // pred_check
      _
    $region19: #{tpu_custom_call.1} parent=1 // pred_check_branch
      %70 = sbr.rel (0) target = $region21
    $region20: #{tpu_custom_call.1} parent=1 // pred_region
      %71 = dma.done [#allocation4], 32
    $region21: #{tpu_custom_call.1} parent=1 // pred_fallthru
      _
    %72 = vsyncpa [#allocation4], 1

</llo_original>
